<compile_context>
chip_gen: v7x
topology: tpu7x:2x2x1
jax: 0.10.0
libtpu: 0.0.40
codegen_flags: <defaults>
</compile_context>

<pallas_src>
import jax
import jax.numpy as jnp
from jax.experimental import pallas as pl
from jax.experimental.pallas import tpu as pltpu


def _mask_kernel(keep_ref, x_ref, o_ref):
    # keep_ref: int8 0/1 mask (~isnan of the tensor captured at __init__)
    # x_ref:    the forward() input
    x = x_ref[...]
    keep = keep_ref[...].astype(x.dtype)   # 0/1 in x's dtype
    o_ref[...] = keep * x                  # float multiply => 0*NaN = NaN, as in PyTorch


def _round_up(v, m):
    return ((v + m - 1) // m) * m


def _cdiv(a, b):
    return -(-a // b)


def _tiled_mask(keep_i8, x, target_block_bytes, *, min_grid_steps=4):
    """Batch-tiled elementwise keep*x with no padding (partial last block is masked)."""
    B, F = x.shape
    itemsize = x.dtype.itemsize

    # tile_b multiple of 32 satisfies int8 (32,128), bf16 (16,128) and f32 (8,128)
    # sublane tiling; last dim stays the full F so any feature count is legal.
    rows_budget = max(32, (target_block_bytes // max(1, F * itemsize)) // 32 * 32)
    rows_for_steps = max(32, _round_up(_cdiv(B, min_grid_steps), 32))   # >=4 grid steps
    tile_b = min(rows_budget, rows_for_steps, _round_up(B, 32))
    grid_b = _cdiv(B, tile_b)   # partial last block: OOB writes masked by Pallas

    # Double-buffered keep(int8) + x + out per block, plus slack; explicit so the v5e
    # 16 MiB scoped default does not reject larger tiles. Capped at v7x physical 64 MiB.
    block_bytes = tile_b * F * (1 + 2 * itemsize)
    vmem_limit = min(64 << 20, max(32 << 20, 2 * block_bytes + (4 << 20)))

    cost = pl.CostEstimate(
        flops=B * F,
        transcendentals=0,
        bytes_accessed=B * F * (1 + 2 * itemsize),   # keep + x read + out write
    )

    return pl.pallas_call(
        _mask_kernel,
        out_shape=jax.ShapeDtypeStruct((B, F), x.dtype),
        grid_spec=pltpu.PrefetchScalarGridSpec(
            num_scalar_prefetch=0,
            grid=(grid_b,),
            in_specs=[
                pl.BlockSpec((tile_b, F), lambda i: (i, 0)),   # keep (int8)
                pl.BlockSpec((tile_b, F), lambda i: (i, 0)),   # x
            ],
            out_specs=pl.BlockSpec((tile_b, F), lambda i: (i, 0)),
        ),
        compiler_params=pltpu.CompilerParams(
            dimension_semantics=("parallel",),
            vmem_limit_bytes=int(vmem_limit),
        ),
        cost_estimate=cost,
    )(keep_i8, x)


def mask_apply(keep_i8, x, *, target_block_bytes=4 << 20, min_pallas_bytes=256 << 10):
    """Apply the Mask non-linearity: keep * x elementwise (keep = ~isnan(ref))."""
    assert keep_i8.shape == x.shape and x.ndim == 2
    B, F = x.shape
    x_bytes = B * F * x.dtype.itemsize

    # ---- Tiny-input bypass: launch overhead dominates; let XLA fuse a plain multiply. ----
    if x_bytes < min_pallas_bytes:
        return keep_i8.astype(x.dtype) * x

    # ---- Lane-dense path for narrow feature counts (F < 128, common NeuMiss case). ----
    # Row-major reshape keeps elementwise correspondence exact; output stores become
    # full unmasked 128-lane writes.  (If XLA relayout cost ever bites, measure the net.)
    if F < 128 and (B * F) % 128 == 0:
        N = (B * F) // 128
        out = _tiled_mask(keep_i8.reshape(N, 128), x.reshape(N, 128), target_block_bytes)
        return out.reshape(B, F)

    return _tiled_mask(keep_i8, x, target_block_bytes)


class Mask:
    """JAX/Pallas port of the PyTorch Mask module (no learnable parameters)."""

    def __init__(self, input_with_nans):
        # Precompute ~isnan once (plain JAX), stored as a compact int8 buffer; the
        # forward kernel then only streams keep(int8) + x + out.
        self.keep = jnp.logical_not(jnp.isnan(input_with_nans)).astype(jnp.int8)

    def __call__(self, x):
        return mask_apply(self.keep, x)


if __name__ == "__main__":
    key = jax.random.PRNGKey(0)

    # ---- 1) Tiny tabular-style shape (NeuMiss operates on (batch, n_features)) ----
    #      -> exercises the plain-jnp bypass.
    k_ref, k_nan, k_x = jax.random.split(key, 3)
    B, F = 16, 128
    ref = jax.random.normal(k_ref, (B, F), dtype=jnp.float32)
    ref = jnp.where(jax.random.bernoulli(k_nan, 0.3, (B, F)), jnp.nan, ref)
    x = jax.random.normal(k_x, (B, F), dtype=jnp.float32)
    mask_mod = Mask(ref)
    out = jax.block_until_ready(mask_mod(x))
    expected = (~jnp.isnan(ref)).astype(x.dtype) * x
    assert out.shape == x.shape and out.dtype == x.dtype
    assert jnp.allclose(out, expected), "mismatch vs reference (tiny bypass)"

    # ---- 2) Ragged batch, narrow features -> forced Pallas tiled path with a
    #      partial (masked) last block and the lane-dense (N,128) reshape.
    k2_ref, k2_nan, k2_x = jax.random.split(jax.random.PRNGKey(1), 3)
    B2, F2 = 300, 64
    ref2 = jax.random.normal(k2_ref, (B2, F2), dtype=jnp.float32)
    ref2 = jnp.where(jax.random.bernoulli(k2_nan, 0.3, (B2, F2)), jnp.nan, ref2)
    x2 = jax.random.normal(k2_x, (B2, F2), dtype=jnp.float32)
    keep2 = jnp.logical_not(jnp.isnan(ref2)).astype(jnp.int8)
    out2 = jax.block_until_ready(
        mask_apply(keep2, x2, target_block_bytes=32 * 1024, min_pallas_bytes=0))
    expected2 = (~jnp.isnan(ref2)).astype(x2.dtype) * x2
    assert out2.shape == x2.shape and out2.dtype == x2.dtype
    assert jnp.allclose(out2, expected2), "mismatch vs reference (ragged tiled path)"

    # ---- 3) Moderate f32 shape with default params -> multi-step pipelined Pallas path.
    k3_ref, k3_nan, k3_x = jax.random.split(jax.random.PRNGKey(2), 3)
    B3, F3 = 512, 256
    ref3 = jax.random.normal(k3_ref, (B3, F3), dtype=jnp.float32)
    ref3 = jnp.where(jax.random.bernoulli(k3_nan, 0.25, (B3, F3)), jnp.nan, ref3)
    x3 = jax.random.normal(k3_x, (B3, F3), dtype=jnp.float32)
    keep3 = jnp.logical_not(jnp.isnan(ref3)).astype(jnp.int8)
    out3 = jax.block_until_ready(mask_apply(keep3, x3))
    expected3 = (~jnp.isnan(ref3)).astype(x3.dtype) * x3
    assert jnp.allclose(out3, expected3), "mismatch vs reference (f32 tiled path)"

    # ---- 4) bf16 input -> validates dtype-aware (itemsize) tile sizing.
    k4_ref, k4_nan, k4_x = jax.random.split(jax.random.PRNGKey(3), 3)
    B4, F4 = 256, 512
    ref4 = jax.random.normal(k4_ref, (B4, F4), dtype=jnp.float32)
    ref4 = jnp.where(jax.random.bernoulli(k4_nan, 0.25, (B4, F4)), jnp.nan, ref4)
    x4 = jax.random.normal(k4_x, (B4, F4), dtype=jnp.float32).astype(jnp.bfloat16)
    keep4 = jnp.logical_not(jnp.isnan(ref4)).astype(jnp.int8)
    out4 = jax.block_until_ready(mask_apply(keep4, x4))
    expected4 = keep4.astype(jnp.bfloat16) * x4
    assert out4.dtype == jnp.bfloat16
    assert jnp.allclose(out4, expected4), "mismatch vs reference (bf16 tiled path)"

    print("KERNEL_OK")
</pallas_src>

<mosaic_0001>
module attributes {stable_mosaic.version = 11 : i64} {
  func.func @_mask_kernel(%arg0: i32, %arg1: memref<64x128xi8, #tpu.memory_space<vmem>>, %arg2: memref<64x128xf32, #tpu.memory_space<vmem>>, %arg3: memref<64x128xf32, #tpu.memory_space<vmem>>) attributes {dimension_semantics = [#tpu.dimension_semantics<parallel>], iteration_bounds = array<i64: 3>, scalar_prefetch = 0 : i64, scratch_operands = 0 : i64, tpu.core_type = #tpu.core_type<tc>, window_params = [{transform_indices = @transform_0, window_bounds = array<i64: 64, 128>}, {transform_indices = @transform_1, window_bounds = array<i64: 64, 128>}, {transform_indices = @transform_2, window_bounds = array<i64: 64, 128>}]} {
    %c0 = arith.constant 0 : index
    %c0_0 = arith.constant 0 : index
    %0 = vector.load %arg2[%c0, %c0_0] : memref<64x128xf32, #tpu.memory_space<vmem>>, vector<64x128xf32>
    %c0_1 = arith.constant 0 : index
    %c0_2 = arith.constant 0 : index
    %1 = vector.load %arg1[%c0_1, %c0_2] : memref<64x128xi8, #tpu.memory_space<vmem>>, vector<64x128xi8>
    %2 = arith.sitofp %1 : vector<64x128xi8> to vector<64x128xf32>
    %3 = arith.mulf %2, %0 : vector<64x128xf32>
    %c0_3 = arith.constant 0 : index
    %c0_4 = arith.constant 0 : index
    %4 = vector.load %arg3[%c0_3, %c0_4] : memref<64x128xf32, #tpu.memory_space<vmem>>, vector<64x128xf32>
    tpu.vector_store %arg3[%c0_3, %c0_4], %3 {strides = array<i32>} : memref<64x128xf32, #tpu.memory_space<vmem>>, vector<64x128xf32>,
    return
  }
  func.func @transform_0(%arg0: i32) -> (i32, i32) {
    %c0_i32 = arith.constant 0 : i32
    %c0_i32_0 = arith.constant 0 : i32
    return %arg0, %c0_i32 : i32, i32
  }
  func.func @transform_1(%arg0: i32) -> (i32, i32) {
    %c0_i32 = arith.constant 0 : i32
    %c0_i32_0 = arith.constant 0 : i32
    return %arg0, %c0_i32 : i32, i32
  }
  func.func @transform_2(%arg0: i32) -> (i32, i32) {
    %c0_i32 = arith.constant 0 : i32
    %c0_i32_0 = arith.constant 0 : i32
    return %arg0, %c0_i32 : i32, i32
  }
}

</mosaic_0001>

<llo_original>
// kernel: tpu_custom_call.1
$region0: #{tpu_custom_call.1}
  #allocation0 [shape = 'u32[]', space=smem, size = 0x4, offset = 0x4, fixed_abs, tag = 'smem constant byte address 0x4 - core index']
  #allocation1 [shape = 'u32[144,128]{1,0:T(1,128)}', space=vmem, size = 0x12000, scoped, tag = 'internal scratch']
  %s0 = inlined_call_operand.hbm [shape: s8[150,128], index: 0, kind: input, shape index: {}]
  %s1 = inlined_call_operand.hbm [shape: f32[150,128], index: 1, kind: input, shape index: {}]
  %s2 = inlined_call_operand.hbm [shape: f32[150,128], index: 2, kind: output, shape index: {}]
  %s3 = sld [smem:[#allocation0]]
  $region49: #{tpu_custom_call.1} parent=0
    _
  %s5 = ssub.s32 1, %s3
  %s6 = scalar_select 0, %s5, %s3
  $region1: #{tpu_custom_call.1} parent=0
    #allocation2 [shape = 'u8[16384]{0}', space=vmem, size = 0x4000, scoped, tag = 'input window, operand 0']
    #allocation3 [shape = 's32[2]{0}', space=sflag, size = 0x8, scoped, tag = 'scoped memory for tpu_custom_call.1']
    #allocation4 [shape = 's32[2]{0}', space=sflag, size = 0x8, scoped, tag = 'scoped memory for tpu_custom_call.1']
    #allocation5 [shape = 'u8[65536]{0}', space=vmem, size = 0x10000, scoped, tag = 'input window, operand 1']
    #allocation6 [shape = 's32[2]{0}', space=sflag, size = 0x8, scoped, tag = 'scoped memory for tpu_custom_call.1']
    #allocation7 [shape = 'u8[65536]{0}', space=vmem, size = 0x10000, scoped, tag = 'output window, operand 0']
    %7 = vsyncpa [#allocation3], 0
    %s8 = scalar_lea.sflag [#allocation3], 1
    %9 = vsyncpa %s8, 0
    %10 = vsyncpa [#allocation6], 0
    %s11 = scalar_lea.sflag [#allocation6], 1
    %12 = vsyncpa %s11, 0
    %13 = vsyncpa [#allocation4], 0
    %s14 = scalar_lea.sflag [#allocation4], 1
    %15 = vsyncpa %s14, 0
    loop: start=0, step=1, limit=5
    $region2: #{tpu_custom_call.1} parent=1 // loop_pre_header
      _
    $region3: #{tpu_custom_call.1} parent=1 // loop_header
      %s17 = sphi 0, %s21
      %p18 = scmp.ge.s32.totalorder %s17, 5
      %s27 = sphi 0, %s29
      %s30 = sphi 0, %s27
      %s31 = sphi 0, %s30
      %s47 = sphi 0, %s31
      %s53 = sphi 0, %s55
      %s56 = sphi 0, %s53
      %s57 = sphi 0, %s56
      %s73 = sphi 0, %s57
      %s79 = sphi 0, %s81
      %s82 = sphi 0, %s79
      %s83 = sphi 0, %s82
      %s99 = sphi 0, %s83
    $region4: #{tpu_custom_call.1} parent=1 // loop_header_branch
      %20 = sbr.rel (%p18) target = $region8
    $region5: #{tpu_custom_call.1} parent=1 // loop_body
      %s22 = ssub.s32 %s17, 1
      %s23 = ssub.s32 %s17, 2
      %s24 = sadd.s32 %s17, 1
      %s25 = ssub.s32 %s17, %s24
      %p26 = scmp.eq.s32.totalorder %s25, 0
      %s28 = sadd.s32 %s27, 1
      %s29 = scalar_select %p26, %s27, %s28
      %p32 = pneg %p26
      %p33 = scmp.eq.s32.totalorder %s17, 2
      %p34 = por %p32, %p33
      %p35 = scmp.ne.s32.totalorder %s27, %s30
      %p36 = scmp.eq.s32.totalorder %s17, 0
      %p37 = por %p35, %p36
      %p38 = scmp.ne.s32.totalorder %s27, %s30
      %p39 = scmp.eq.s32.totalorder %s22, 2
      %p40 = por %p38, %p39
      %p41 = scmp.ne.s32.totalorder %s30, %s31
      %p42 = scmp.eq.s32.totalorder %s22, 0
      %p43 = por %p41, %p42
      %p44 = scmp.ne.s32.totalorder %s30, %s31
      %p45 = scmp.eq.s32.totalorder %s23, 2
      %p46 = por %p44, %p45
      %p48 = scmp.ne.s32.totalorder %s31, %s47
      %p49 = scmp.eq.s32.totalorder %s23, 0
      %p50 = por %p48, %p49
      %s51 = ssub.s32 %s17, %s24
      %p52 = scmp.eq.s32.totalorder %s51, 0
      %s54 = sadd.s32 %s53, 1
      %s55 = scalar_select %p52, %s53, %s54
      %p58 = pneg %p52
      %p59 = scmp.eq.s32.totalorder %s17, 2
      %p60 = por %p58, %p59
      %p61 = scmp.ne.s32.totalorder %s53, %s56
      %p62 = scmp.eq.s32.totalorder %s17, 0
      %p63 = por %p61, %p62
      %p64 = scmp.ne.s32.totalorder %s53, %s56
      %p65 = scmp.eq.s32.totalorder %s22, 2
      %p66 = por %p64, %p65
      %p67 = scmp.ne.s32.totalorder %s56, %s57
      %p68 = scmp.eq.s32.totalorder %s22, 0
      %p69 = por %p67, %p68
      %p70 = scmp.ne.s32.totalorder %s56, %s57
      %p71 = scmp.eq.s32.totalorder %s23, 2
      %p72 = por %p70, %p71
      %p74 = scmp.ne.s32.totalorder %s57, %s73
      %p75 = scmp.eq.s32.totalorder %s23, 0
      %p76 = por %p74, %p75
      %s77 = ssub.s32 %s17, %s24
      %p78 = scmp.eq.s32.totalorder %s77, 0
      %s80 = sadd.s32 %s79, 1
      %s81 = scalar_select %p78, %s79, %s80
      %p84 = pneg %p78
      %p85 = scmp.eq.s32.totalorder %s17, 2
      %p86 = por %p84, %p85
      %p87 = scmp.ne.s32.totalorder %s79, %s82
      %p88 = scmp.eq.s32.totalorder %s17, 0
      %p89 = por %p87, %p88
      %p90 = scmp.ne.s32.totalorder %s79, %s82
      %p91 = scmp.eq.s32.totalorder %s22, 2
      %p92 = por %p90, %p91
      %p93 = scmp.ne.s32.totalorder %s82, %s83
      %p94 = scmp.eq.s32.totalorder %s22, 0
      %p95 = por %p93, %p94
      %p96 = scmp.ne.s32.totalorder %s82, %s83
      %p97 = scmp.eq.s32.totalorder %s23, 2
      %p98 = por %p96, %p97
      %p100 = scmp.ne.s32.totalorder %s83, %s99
      %p101 = scmp.eq.s32.totalorder %s23, 0
      %p102 = por %p100, %p101
      %p103 = scmp.le.s32.totalorder 1, %s17
      %p104 = scmp.lt.s32.totalorder %s17, 4
      %p105 = pnand %p103, %p104
      %p106 = pneg %p105
      // Predicated region
      $region9: #{tpu_custom_call.1} parent=5 // pred_check
        _
      $region10: #{tpu_custom_call.1} parent=5 // pred_check_branch
        %108 = sbr.rel (%p105) target = $region12
      $region11: #{tpu_custom_call.1} parent=5 // pred_region
        %s109 = ssub.s32 %s17, 1
      $region12: #{tpu_custom_call.1} parent=5 // pred_fallthru
        _
      %p110 = scmp.lt.s32.totalorder %s17, 3
      // Predicated region
      $region13: #{tpu_custom_call.1} parent=5 // pred_check
        %p111 = pneg %p110
      $region14: #{tpu_custom_call.1} parent=5 // pred_check_branch
        %113 = sbr.rel (%p111) target = $region16
      $region15: #{tpu_custom_call.1} parent=5 // pred_region
        // Predicated region
        $region17: #{tpu_custom_call.1} parent=15 // pred_check
          %p114 = pneg %p37
        $region18: #{tpu_custom_call.1} parent=15 // pred_check_branch
          %116 = sbr.rel (%p114) target = $region20
        $region19: #{tpu_custom_call.1} parent=15 // pred_region
          %s117 = sand.u32 %s27, 1
          %s118 = scalar_lea.sflag [#allocation3], %s117
          %s119 = sand.u32 %s27, 1
          %s120 = smul.addr %s119, 16
          %s121 = scalar_lea.vmem [#allocation2], %s120
          %s122 = smul.u32 8, %s17
          %s123 = ssub.s32 19, %s122
          %p124 = scmp.lt.s32.totalorder %s123, 8
          %s125 = scalar_select %p124, %s123, 8
          %s126 = smul.u32 32, %s125
          %s128 = ssub.s32 256, %s126
          %129 = vsyncadd %s118, %s128
          %p130 = scmp.ne.s32.totalorder 0, %s126
          %s131 = smul.addr %s122, 32
          %s132 = scalar_lea.hbm %s0, %s131
          %s133 = smul.u32 2, %s125
          %s134 = sshll.u32 %s121, 4
          %s135 = int_to_ptr.vmem [resolvable:$true] %s134
          %s136 = sshll.u32 %s133, 4
          %140 = dma.hbm_to_vmem [thread:$0]  (%p130), %s132, %s136, %s135, %s118, 32, 32, 2
        $region20: #{tpu_custom_call.1} parent=15 // pred_fallthru
          _
        // Predicated region
        $region21: #{tpu_custom_call.1} parent=15 // pred_check
          %p141 = pneg %p63
        $region22: #{tpu_custom_call.1} parent=15 // pred_check_branch
          %143 = sbr.rel (%p141) target = $region24
        $region23: #{tpu_custom_call.1} parent=15 // pred_region
          %s144 = sand.u32 %s53, 1
          %s145 = scalar_lea.sflag [#allocation6], %s144
          %s146 = sand.u32 %s53, 1
          %s147 = smul.addr %s146, 64
          %s148 = scalar_lea.vmem [#allocation5], %s147
          %s149 = smul.u32 8, %s17
          %s150 = ssub.s32 19, %s149
          %p151 = scmp.lt.s32.totalorder %s150, 8
          %s152 = scalar_select %p151, %s150, 8
          %s153 = smul.u32 128, %s152
          %s155 = ssub.s32 1024, %s153
          %156 = vsyncadd %s145, %s155
          %p157 = scmp.ne.s32.totalorder 0, %s153
          %s158 = smul.addr %s149, 128
          %s159 = scalar_lea.hbm %s1, %s158
          %s160 = smul.u32 8, %s152
          %s161 = sshll.u32 %s148, 4
          %s162 = int_to_ptr.vmem [resolvable:$true] %s161
          %s163 = sshll.u32 %s160, 4
          %167 = dma.hbm_to_vmem [thread:$0]  (%p157), %s159, %s163, %s162, %s145, 128, 128, 8
        $region24: #{tpu_custom_call.1} parent=15 // pred_fallthru
          _
      $region16: #{tpu_custom_call.1} parent=5 // pred_fallthru
        _
      %p168 = scmp.le.s32.totalorder 1, %s17
      %p169 = scmp.lt.s32.totalorder %s17, 4
      %p170 = pnand %p168, %p169
      %p171 = pneg %p170
      // Predicated region
      $region25: #{tpu_custom_call.1} parent=5 // pred_check
        _
      $region26: #{tpu_custom_call.1} parent=5 // pred_check_branch
        %173 = sbr.rel (%p170) target = $region28
      $region27: #{tpu_custom_call.1} parent=5 // pred_region
        %s174 = ssub.s32 %s17, 1
        %s175 = sand.u32 %s30, 1
        %s176 = scalar_lea.sflag [#allocation3], %s175
        %s177 = sand.u32 %s30, 1
        %s178 = smul.addr %s177, 16
        %s179 = scalar_lea.vmem [#allocation2], %s178
        // Predicated region
        $region29: #{tpu_custom_call.1} parent=27 // pred_check
          %p180 = pneg %p43
        $region30: #{tpu_custom_call.1} parent=27 // pred_check_branch
          %182 = sbr.rel (%p180) target = $region32
        $region31: #{tpu_custom_call.1} parent=27 // pred_region
          %183 = dma.done %s176, 256
        $region32: #{tpu_custom_call.1} parent=27 // pred_fallthru
          _
        %s184 = sand.u32 %s56, 1
        %s185 = scalar_lea.sflag [#allocation6], %s184
        %s186 = sand.u32 %s56, 1
        %s187 = smul.addr %s186, 64
        %s188 = scalar_lea.vmem [#allocation5], %s187
        // Predicated region
        $region33: #{tpu_custom_call.1} parent=27 // pred_check
          %p189 = pneg %p69
        $region34: #{tpu_custom_call.1} parent=27 // pred_check_branch
          %191 = sbr.rel (%p189) target = $region36
        $region35: #{tpu_custom_call.1} parent=27 // pred_region
          %192 = dma.done %s185, 1024
        $region36: #{tpu_custom_call.1} parent=27 // pred_fallthru
          _
        %s193 = sand.u32 %s30, 1
        %s194 = scalar_lea.sflag [#allocation3], %s193
        %s195 = sand.u32 %s30, 1
        %s196 = smul.addr %s195, 16
        %s197 = scalar_lea.vmem [#allocation2], %s196
        %p198 = pneg %p43
        %p199 = pneg %p40
        %s200 = sand.u32 %s56, 1
        %s201 = scalar_lea.sflag [#allocation6], %s200
        %s202 = sand.u32 %s56, 1
        %s203 = smul.addr %s202, 64
        %s204 = scalar_lea.vmem [#allocation5], %s203
        %p205 = pneg %p69
        %p206 = pneg %p66
        %p207 = pneg %p95
        %p208 = pneg %p92
        %s209 = sand.u32 %s82, 1
        %s210 = scalar_lea.sflag [#allocation4], %s209
        %s211 = sand.u32 %s82, 1
        %s212 = smul.addr %s211, 64
        %s213 = scalar_lea.vmem [#allocation7], %s212
        %s214 = smul.u32 8, %s22
        %s215 = ssub.s32 19, %s214
        %p216 = scmp.lt.s32.totalorder %s215, 8
        %s217 = scalar_select %p216, %s215, 8
        %s218 = smul.u32 32, %s217
        %s219 = smul.u32 8, %s22
        %s220 = ssub.s32 19, %s219
        %p221 = scmp.lt.s32.totalorder %s220, 8
        %s222 = scalar_select %p221, %s220, 8
        %s223 = smul.u32 128, %s222
        %s224 = smul.u32 8, %s22
        %s225 = ssub.s32 19, %s224
        %p226 = scmp.lt.s32.totalorder %s225, 8
        %s227 = scalar_select %p226, %s225, 8
        %s228 = smul.u32 128, %s227
        %v229 = vld [vmem:[%s188] sm:$0xff]
        %v230 = vld [vmem:[%s188 + $0x8] sm:$0xff]
        %v231 = vld [vmem:[%s188 + $0x10] sm:$0xff]
        %v232 = vld [vmem:[%s188 + $0x18] sm:$0xff]
        %v233 = vld [vmem:[%s188 + $0x20] sm:$0xff]
        %v234 = vld [vmem:[%s188 + $0x28] sm:$0xff]
        %v235 = vld [vmem:[%s188 + $0x30] sm:$0xff]
        %v236 = vld [vmem:[%s188 + $0x38] sm:$0xff]
        %v237 = vld [vmem:[%s179] sm:$0x3]
        %v238 = vld [vmem:[%s179 + $0x2] sm:$0x3]
        %v239 = vld [vmem:[%s179 + $0x4] sm:$0x3]
        %v240 = vld [vmem:[%s179 + $0x6] sm:$0x3]
        %v241 = vld [vmem:[%s179 + $0x8] sm:$0x3]
        %v242 = vld [vmem:[%s179 + $0xa] sm:$0x3]
        %v243 = vld [vmem:[%s179 + $0xc] sm:$0x3]
        %v244 = vld [vmem:[%s179 + $0xe] sm:$0x3]
        %v245 = vunpack.c.0.s8 %v237
        %v246 = vunpack.c.0.s8 %v238
        %v247 = vunpack.c.0.s8 %v239
        %v248 = vunpack.c.0.s8 %v240
        %v249 = vunpack.c.0.s8 %v241
        %v250 = vunpack.c.0.s8 %v242
        %v251 = vunpack.c.0.s8 %v243
        %v252 = vunpack.c.0.s8 %v244
        %v253 = vcvt.s32.f32 %v245
        %v254 = vcvt.s32.f32 %v246
        %v255 = vcvt.s32.f32 %v247
        %v256 = vcvt.s32.f32 %v248
        %v257 = vcvt.s32.f32 %v249
        %v258 = vcvt.s32.f32 %v250
        %v259 = vcvt.s32.f32 %v251
        %v260 = vcvt.s32.f32 %v252
        %v261 = vmul.f32 %v253, %v229
        %v262 = vmul.f32 %v254, %v230
        %v263 = vmul.f32 %v255, %v231
        %v264 = vmul.f32 %v256, %v232
        %v265 = vmul.f32 %v257, %v233
        %v266 = vmul.f32 %v258, %v234
        %v267 = vmul.f32 %v259, %v235
        %v268 = vmul.f32 %v260, %v236
        %269 = vst [vmem:[%s213] sm:$0xff] %v261
        %270 = vst [vmem:[%s213 + $0x8] sm:$0xff] %v262
        %271 = vst [vmem:[%s213 + $0x10] sm:$0xff] %v263
        %272 = vst [vmem:[%s213 + $0x18] sm:$0xff] %v264
        %273 = vst [vmem:[%s213 + $0x20] sm:$0xff] %v265
        %274 = vst [vmem:[%s213 + $0x28] sm:$0xff] %v266
        %275 = vst [vmem:[%s213 + $0x30] sm:$0xff] %v267
        %276 = vst [vmem:[%s213 + $0x38] sm:$0xff] %v268
        %s277 = sand.u32 %s82, 1
        %s278 = scalar_lea.sflag [#allocation4], %s277
        %s279 = sand.u32 %s82, 1
        %s280 = smul.addr %s279, 64
        %s281 = scalar_lea.vmem [#allocation7], %s280
        // Predicated region
        $region37: #{tpu_custom_call.1} parent=27 // pred_check
          %p282 = pneg %p92
        $region38: #{tpu_custom_call.1} parent=27 // pred_check_branch
          %284 = sbr.rel (%p282) target = $region40
        $region39: #{tpu_custom_call.1} parent=27 // pred_region
          %s285 = smul.u32 8, %s22
          %s286 = ssub.s32 19, %s285
          %p287 = scmp.lt.s32.totalorder %s286, 8
          %s288 = scalar_select %p287, %s286, 8
          %s289 = smul.u32 128, %s288
          %s291 = ssub.s32 1024, %s289
          %292 = vsyncadd %s278, %s291
          %p293 = scmp.ne.s32.totalorder 0, %s289
          %s294 = smul.addr %s285, 128
          %s295 = scalar_lea.hbm %s2, %s294
          %s296 = smul.u32 8, %s288
          %s297 = sshll.u32 %s281, 4
          %s298 = int_to_ptr.vmem [resolvable:$true] %s297
          %s299 = sshll.u32 %s296, 4
          %303 = dma.vmem_to_hbm [thread:$0]  (%p293), %s298, %s299, %s295, %s278, 128, 128, 8
        $region40: #{tpu_custom_call.1} parent=27 // pred_fallthru
          _
      $region28: #{tpu_custom_call.1} parent=5 // pred_fallthru
        _
      %p304 = scmp.le.s32.totalorder 2, %s17
      // Predicated region
      $region41: #{tpu_custom_call.1} parent=5 // pred_check
        %p305 = pneg %p304
      $region42: #{tpu_custom_call.1} parent=5 // pred_check_branch
        %307 = sbr.rel (%p305) target = $region44
      $region43: #{tpu_custom_call.1} parent=5 // pred_region
        %s308 = ssub.s32 %s17, 2
        // Predicated region
        $region45: #{tpu_custom_call.1} parent=43 // pred_check
          %p309 = pneg %p98
        $region46: #{tpu_custom_call.1} parent=43 // pred_check_branch
          %311 = sbr.rel (%p309) target = $region48
        $region47: #{tpu_custom_call.1} parent=43 // pred_region
          %s312 = sand.u32 %s83, 1
          %s313 = scalar_lea.sflag [#allocation4], %s312
          %s314 = sand.u32 %s83, 1
          %s315 = smul.addr %s314, 64
          %s316 = scalar_lea.vmem [#allocation7], %s315
          %317 = dma.done %s313, 1024
        $region48: #{tpu_custom_call.1} parent=43 // pred_fallthru
          _
      $region44: #{tpu_custom_call.1} parent=5 // pred_fallthru
        _
    $region6: #{tpu_custom_call.1} parent=1 // loop_footer
      %s21 = sadd.s32 1, %s17
    $region7: #{tpu_custom_call.1} parent=1 // loop_footer_branch
      %16 = sbr.rel target = $region3
    $region8: #{tpu_custom_call.1} parent=1 // loop_exit
      _
    %318 = vsyncpa [#allocation3], 1
    %s319 = scalar_lea.sflag [#allocation3], 1
    %320 = vsyncpa %s319, 1
    %321 = vsyncpa [#allocation6], 1
    %s322 = scalar_lea.sflag [#allocation6], 1
    %323 = vsyncpa %s322, 1
    %324 = vsyncpa [#allocation4], 1
    %s325 = scalar_lea.sflag [#allocation4], 1
    %326 = vsyncpa %s325, 1

</llo_original>
